<compile_context>
chip_gen: v7x
topology: tpu7x:2x2x1
jax: 0.10.0
libtpu: 0.0.40
codegen_flags: <defaults>
</compile_context>

<pallas_src>
import functools

import jax
import jax.numpy as jnp
import numpy as np
from jax.experimental import pallas as pl
from jax.experimental.pallas import tpu as pltpu


def _round_up(x, m):
    return (x + m - 1) // m * m


def _group_norm_kernel(x_ref, p_ref, w_ref, b_ref, o_ref, *, eps):
    """One (batch, channel-tile) block per grid step.

    x_ref: (ct, S)   ct channels (whole groups) on sublanes, spatial on lanes
    p_ref: (ct, ct)  same-group membership / (Cg*S), resident in VMEM
    w_ref: (C, 1)    gamma, resident
    b_ref: (C, 1)    beta, resident
    o_ref: (ct, S)   output, same dtype as the input
    """
    j = pl.program_id(1)
    ct = x_ref.shape[0]

    pmat = p_ref[...]  # (ct, ct) f32, rows pre-scaled by 1/(Cg*S)

    # Pass 1: per-channel lane reduce, then per-group mean broadcast back to
    # each channel via the tiny membership matmul (MXU, essentially free).
    row_sum = jnp.sum(x_ref[...].astype(jnp.float32), axis=1, keepdims=True)  # (ct, 1)
    mean = jnp.dot(pmat, row_sum, preferred_element_type=jnp.float32)         # (ct, 1)

    # Pass 2: centered sum-of-squares -> biased per-group variance (matches
    # PyTorch GroupNorm; avoids E[x^2]-mean^2 cancellation).
    d = x_ref[...].astype(jnp.float32) - mean
    row_ss = jnp.sum(d * d, axis=1, keepdims=True)                            # (ct, 1)
    var = jnp.dot(pmat, row_ss, preferred_element_type=jnp.float32)           # (ct, 1)
    inv_std = jax.lax.rsqrt(var + eps)                                        # EUP rsqrt

    # Fused affine epilogue: fold mean/inv_std/gamma/beta into per-channel
    # scale & shift (tiny), then a single x*scale+shift pass over the block.
    start = pl.multiple_of(j * ct, ct)
    gamma = w_ref[pl.ds(start, ct), :].astype(jnp.float32)                    # (ct, 1)
    beta = b_ref[pl.ds(start, ct), :].astype(jnp.float32)                     # (ct, 1)
    scale = inv_std * gamma
    shift = beta - mean * scale
    o_ref[...] = (x_ref[...].astype(jnp.float32) * scale + shift).astype(o_ref.dtype)


def normalization_layer(x, weight, bias, *, num_groups=32, eps=1e-5):
    """GroupNorm(num_groups, C)(x.float()).astype(x.dtype); x is (N, C, *spatial)."""
    N, C = int(x.shape[0]), int(x.shape[1])
    G = int(num_groups)
    assert C % G == 0, (C, G)
    cg = C // G
    S = 1
    for dim in x.shape[2:]:
        S *= int(dim)

    # Contiguous reshapes only -- no extra HBM passes.
    x_3d = x.reshape(N, C, S)
    w_2d = weight.reshape(C, 1)
    b_2d = bias.reshape(C, 1)

    itemsize = np.dtype(x.dtype).itemsize

    # --- VMEM limits (padded-layout aware) -------------------------------
    try:
        cap = int(getattr(pltpu.get_tpu_info(), "vmem_capacity_bytes", 64 << 20))
    except Exception:  # pragma: no cover - defensive
        cap = 64 << 20
    vmem_limit = max(32 << 20, min(cap * 3 // 4, 96 << 20))
    budget = vmem_limit // 2  # headroom for compiler scratch / spills

    def block_cost(ct):
        pr = _round_up(ct, 8)          # sublane padding
        pc = _round_up(S, 128)         # lane padding
        io = 2 * 2 * pr * pc * itemsize        # in + out blocks, double buffered
        temps = 2 * pr * pc * 4                # live f32 working blocks
        pmat = pr * _round_up(ct, 128) * 4     # resident membership matrix
        wb = 2 * _round_up(C, 8) * 128 * 4     # resident gamma / beta
        return io + temps + pmat + wb

    # Channel-tile candidates: divide C, cover whole groups, sublane-dense
    # (multiple of 8) or the full channel extent.
    cands = [d for d in range(C, 0, -1)
             if C % d == 0 and d % cg == 0 and (d % 8 == 0 or d == C)]
    fitting = [d for d in cands if block_cost(d) <= budget]
    if fitting:
        # Prefer >= 4 total grid steps (>= 2 per TensorCore) when possible.
        stepped = [d for d in fitting if N * (C // d) >= 4]
        ct = (stepped or fitting)[0]
    else:
        # TODO(synk): for very large spatial extents, stream over S with an
        # 'arbitrary' accumulation grid axis instead of one oversized block.
        ct = cands[-1]
        vmem_limit = min(max(vmem_limit, block_cost(ct) + (8 << 20)),
                         max(cap - (8 << 20), 32 << 20))

    # Same-group membership matrix, pre-scaled by 1/(Cg*S): mean = P @ row_sum.
    ids = np.arange(ct) // cg
    p_np = (ids[:, None] == ids[None, :]).astype(np.float32) / float(cg * S)
    p_mat = jnp.asarray(p_np)

    grid = (N, C // ct)
    kernel = functools.partial(_group_norm_kernel, eps=float(eps))

    out = pl.pallas_call(
        kernel,
        out_shape=jax.ShapeDtypeStruct((N, C, S), x.dtype),
        grid_spec=pltpu.PrefetchScalarGridSpec(
            num_scalar_prefetch=0,
            grid=grid,
            in_specs=[
                pl.BlockSpec((None, ct, S), lambda n, j: (n, j, 0)),
                pl.BlockSpec((ct, ct), lambda n, j: (0, 0)),   # resident P
                pl.BlockSpec((C, 1), lambda n, j: (0, 0)),     # resident gamma
                pl.BlockSpec((C, 1), lambda n, j: (0, 0)),     # resident beta
            ],
            out_specs=pl.BlockSpec((None, ct, S), lambda n, j: (n, j, 0)),
        ),
        compiler_params=pltpu.CompilerParams(
            dimension_semantics=("parallel", "parallel"),
            vmem_limit_bytes=int(vmem_limit),
        ),
    )(x_3d, p_mat, w_2d, b_2d)

    return out.reshape(x.shape)


def _reference_group_norm(x, weight, bias, num_groups=32, eps=1e-5):
    N, C = x.shape[0], x.shape[1]
    xf = x.astype(jnp.float32).reshape(N, num_groups, -1)
    mean = xf.mean(axis=2, keepdims=True)
    var = jnp.mean((xf - mean) ** 2, axis=2, keepdims=True)
    y = (xf - mean) / jnp.sqrt(var + eps)
    y = y.reshape(N, C, *x.shape[2:])
    bshape = (1, C) + (1,) * (x.ndim - 2)
    y = (y * weight.astype(jnp.float32).reshape(bshape)
         + bias.astype(jnp.float32).reshape(bshape))
    return y.astype(x.dtype)


if __name__ == "__main__":
    key = jax.random.PRNGKey(0)
    kx, kw, kb = jax.random.split(key, 3)

    # NormalizationLayer(num_channels=64) -> GroupNorm(32, 64); small NCHW input.
    N, C, H, W = 2, 64, 16, 16
    G = 32
    x = jax.random.normal(kx, (N, C, H, W), dtype=jnp.float32)
    weight = jax.random.uniform(kw, (C,), jnp.float32, 0.5, 1.5)
    bias = jax.random.uniform(kb, (C,), jnp.float32, -0.5, 0.5)

    out = jax.block_until_ready(normalization_layer(x, weight, bias, num_groups=G))
    ref = jax.block_until_ready(_reference_group_norm(x, weight, bias, num_groups=G))

    assert out.shape == x.shape, out.shape
    assert out.dtype == x.dtype, out.dtype
    np.testing.assert_allclose(np.asarray(out), np.asarray(ref), atol=1e-4, rtol=1e-4)

    print("KERNEL_OK")
</pallas_src>

<mosaic_0001>
module attributes {stable_mosaic.version = 11 : i64} {
  func.func @_group_norm_kernel(%arg0: i32, %arg1: i32, %arg2: memref<1x32x256xf32, #tpu.memory_space<vmem>>, %arg3: memref<32x32xf32, #tpu.memory_space<vmem>>, %arg4: memref<64x1xf32, #tpu.memory_space<vmem>>, %arg5: memref<64x1xf32, #tpu.memory_space<vmem>>, %arg6: memref<1x32x256xf32, #tpu.memory_space<vmem>>) attributes {dimension_semantics = [#tpu.dimension_semantics<parallel>, #tpu.dimension_semantics<parallel>], iteration_bounds = array<i64: 2, 2>, scalar_prefetch = 0 : i64, scratch_operands = 0 : i64, tpu.core_type = #tpu.core_type<tc>, window_params = [{transform_indices = @transform_0, window_bounds = array<i64: 1, 32, 256>}, {pipeline_mode = #tpu.pipeline_mode<synchronous>, transform_indices = @transform_1, window_bounds = array<i64: 32, 32>}, {pipeline_mode = #tpu.pipeline_mode<synchronous>, transform_indices = @transform_2, window_bounds = array<i64: 64, 1>}, {pipeline_mode = #tpu.pipeline_mode<synchronous>, transform_indices = @transform_3, window_bounds = array<i64: 64, 1>}, {transform_indices = @transform_4, window_bounds = array<i64: 1, 32, 256>}]} {
    %c0 = arith.constant 0 : index
    %c0_0 = arith.constant 0 : index
    %0 = vector.load %arg3[%c0, %c0_0] : memref<32x32xf32, #tpu.memory_space<vmem>>, vector<32x32xf32>
    %c0_1 = arith.constant 0 : index
    %c0_2 = arith.constant 0 : index
    %c0_3 = arith.constant 0 : index
    %1 = vector.load %arg2[%c0_1, %c0_2, %c0_3] : memref<1x32x256xf32, #tpu.memory_space<vmem>>, vector<1x32x256xf32>
    %2 = vector.shape_cast %1 : vector<1x32x256xf32> to vector<32x256xf32>
    %cst = arith.constant dense<0.000000e+00> : vector<32xf32>
    %3 = vector.multi_reduction <add>, %2, %cst [1] : vector<32x256xf32> to vector<32xf32>
    %4 = vector.shape_cast %3 : vector<32xf32> to vector<32x1xf32>
    %cst_4 = arith.constant dense<0.000000e+00> : vector<32x1xf32>
    %5 = tpu.matmul %0, %4, %cst_4 {dimension_numbers = #tpu.dot_dimension_numbers<[1], [0], [0], [1], [0, 0, 1, 1], [], []>} : vector<32x32xf32>, vector<32x1xf32>, vector<32x1xf32> -> vector<32x1xf32>
    %c0_5 = arith.constant 0 : index
    %c0_6 = arith.constant 0 : index
    %c0_7 = arith.constant 0 : index
    %6 = vector.load %arg2[%c0_5, %c0_6, %c0_7] : memref<1x32x256xf32, #tpu.memory_space<vmem>>, vector<1x32x256xf32>
    %7 = vector.shape_cast %6 : vector<1x32x256xf32> to vector<32x256xf32>
    %8 = vector.broadcast %5 : vector<32x1xf32> to vector<32x256xf32>
    %9 = arith.subf %7, %8 : vector<32x256xf32>
    %10 = arith.mulf %9, %9 : vector<32x256xf32>
    %cst_8 = arith.constant dense<0.000000e+00> : vector<32xf32>
    %11 = vector.multi_reduction <add>, %10, %cst_8 [1] : vector<32x256xf32> to vector<32xf32>
    %12 = vector.shape_cast %11 : vector<32xf32> to vector<32x1xf32>
    %cst_9 = arith.constant dense<0.000000e+00> : vector<32x1xf32>
    %13 = tpu.matmul %0, %12, %cst_9 {dimension_numbers = #tpu.dot_dimension_numbers<[1], [0], [0], [1], [0, 0, 1, 1], [], []>} : vector<32x32xf32>, vector<32x1xf32>, vector<32x1xf32> -> vector<32x1xf32>
    %cst_10 = arith.constant 9.99999974E-6 : f32
    %14 = vector.broadcast %cst_10 : f32 to vector<32x1xf32>
    %15 = arith.addf %13, %14 : vector<32x1xf32>
    %16 = math.rsqrt %15 : vector<32x1xf32>
    %c32_i32 = arith.constant 32 : i32
    %17 = arith.muli %arg1, %c32_i32 : i32
    %18 = tpu.assume_multiple %17, 32 : i32
    %19 = arith.index_cast %18 : i32 to index
    %c0_11 = arith.constant 0 : index
    %20 = vector.load %arg4[%19, %c0_11] : memref<64x1xf32, #tpu.memory_space<vmem>>, vector<32x1xf32>
    %21 = arith.index_cast %18 : i32 to index
    %c0_12 = arith.constant 0 : index
    %22 = vector.load %arg5[%21, %c0_12] : memref<64x1xf32, #tpu.memory_space<vmem>>, vector<32x1xf32>
    %23 = arith.mulf %16, %20 : vector<32x1xf32>
    %24 = arith.mulf %5, %23 : vector<32x1xf32>
    %25 = arith.subf %22, %24 : vector<32x1xf32>
    %c0_13 = arith.constant 0 : index
    %c0_14 = arith.constant 0 : index
    %c0_15 = arith.constant 0 : index
    %26 = vector.load %arg2[%c0_13, %c0_14, %c0_15] : memref<1x32x256xf32, #tpu.memory_space<vmem>>, vector<1x32x256xf32>
    %27 = vector.shape_cast %26 : vector<1x32x256xf32> to vector<32x256xf32>
    %28 = vector.broadcast %23 : vector<32x1xf32> to vector<32x256xf32>
    %29 = arith.mulf %27, %28 : vector<32x256xf32>
    %30 = vector.broadcast %25 : vector<32x1xf32> to vector<32x256xf32>
    %31 = arith.addf %29, %30 : vector<32x256xf32>
    %c0_16 = arith.constant 0 : index
    %c0_17 = arith.constant 0 : index
    %c0_18 = arith.constant 0 : index
    %32 = vector.load %arg6[%c0_16, %c0_17, %c0_18] : memref<1x32x256xf32, #tpu.memory_space<vmem>>, vector<1x32x256xf32>
    %33 = vector.shape_cast %32 : vector<1x32x256xf32> to vector<32x256xf32>
    %34 = vector.shape_cast %31 : vector<32x256xf32> to vector<1x32x256xf32>
    tpu.vector_store %arg6[%c0_16, %c0_17, %c0_18], %34 {strides = array<i32>} : memref<1x32x256xf32, #tpu.memory_space<vmem>>, vector<1x32x256xf32>,
    return
  }
  func.func @transform_0(%arg0: i32, %arg1: i32) -> (i32, i32, i32) {
    %c0_i32 = arith.constant 0 : i32
    %c0_i32_0 = arith.constant 0 : i32
    return %arg0, %arg1, %c0_i32 : i32, i32, i32
  }
  func.func @transform_1(%arg0: i32, %arg1: i32) -> (i32, i32) {
    %c0_i32 = arith.constant 0 : i32
    %c0_i32_0 = arith.constant 0 : i32
    %c0_i32_1 = arith.constant 0 : i32
    return %c0_i32, %c0_i32_0 : i32, i32
  }
  func.func @transform_2(%arg0: i32, %arg1: i32) -> (i32, i32) {
    %c0_i32 = arith.constant 0 : i32
    %c0_i32_0 = arith.constant 0 : i32
    %c0_i32_1 = arith.constant 0 : i32
    return %c0_i32, %c0_i32_0 : i32, i32
  }
  func.func @transform_3(%arg0: i32, %arg1: i32) -> (i32, i32) {
    %c0_i32 = arith.constant 0 : i32
    %c0_i32_0 = arith.constant 0 : i32
    %c0_i32_1 = arith.constant 0 : i32
    return %c0_i32, %c0_i32_0 : i32, i32
  }
  func.func @transform_4(%arg0: i32, %arg1: i32) -> (i32, i32, i32) {
    %c0_i32 = arith.constant 0 : i32
    %c0_i32_0 = arith.constant 0 : i32
    return %arg0, %arg1, %c0_i32 : i32, i32, i32
  }
}

</mosaic_0001>

<llo_original>
// kernel: tpu_custom_call.1
$region0: #{tpu_custom_call.1}
  #allocation0 [shape = 'u32[]', space=smem, size = 0x4, offset = 0x4, fixed_abs, tag = 'smem constant byte address 0x4 - core index']
  #allocation1 [shape = 'u32[144,128]{1,0:T(1,128)}', space=vmem, size = 0x12000, scoped, tag = 'internal scratch']
  %s0 = inlined_call_operand.hbm [shape: f32[2,64,256], index: 0, kind: input, shape index: {}]
  %s1 = inlined_call_operand.vmem [shape: f32[32,32], index: 1, kind: input, shape index: {}]
  %s2 = inlined_call_operand.vmem [shape: f32[64,1], index: 2, kind: input, shape index: {}]
  %s3 = inlined_call_operand.vmem [shape: f32[64,1], index: 3, kind: input, shape index: {}]
  %s4 = inlined_call_operand.hbm [shape: f32[2,64,256], index: 4, kind: output, shape index: {}]
  %s5 = sld [smem:[#allocation0]]
  $region53: #{tpu_custom_call.1} parent=0
    _
  %s7 = ssub.s32 1, %s5
  %s8 = scalar_select 0, %s7, %s5
  $region1: #{tpu_custom_call.1} parent=0
    #allocation2 [shape = 'u8[65536]{0}', space=vmem, size = 0x10000, scoped, tag = 'input window, operand 0']
    #allocation3 [shape = 's32[2]{0}', space=sflag, size = 0x8, scoped, tag = 'scoped memory for tpu_custom_call.1']
    #allocation4 [shape = 's32[2]{0}', space=sflag, size = 0x8, scoped, tag = 'scoped memory for tpu_custom_call.1']
    #allocation5 [shape = 'u8[65536]{0}', space=vmem, size = 0x10000, scoped, tag = 'output window, operand 0']
    %9 = vsyncpa [#allocation3], 0
    %s10 = scalar_lea.sflag [#allocation3], 1
    %11 = vsyncpa %s10, 0
    %12 = vsyncpa [#allocation4], 0
    %s13 = scalar_lea.sflag [#allocation4], 1
    %14 = vsyncpa %s13, 0
    loop: start=0, step=1, limit=6
    $region2: #{tpu_custom_call.1} parent=1 // loop_pre_header
      _
    $region3: #{tpu_custom_call.1} parent=1 // loop_header
      %s16 = sphi 0, %s20
      %p17 = scmp.ge.s32.totalorder %s16, 6
      %s23 = sphi 0, %s35
      %s24 = sphi 0, %s31
      %s25 = sphi 0, %s23
      %s26 = sphi 0, %s24
      %s27 = sphi 0, %s25
      %s28 = sphi 0, %s26
      %s40 = sphi 0, %s42
      %s43 = sphi 0, %s40
      %s44 = sphi 0, %s43
      %s60 = sphi 0, %s44
      %s64 = sphi 0, %s64
      %s66 = sphi 0, %s64
      %s67 = sphi 0, %s66
      %s81 = sphi 0, %s67
      %s85 = sphi 0, %s85
      %s87 = sphi 0, %s85
      %s88 = sphi 0, %s87
      %s102 = sphi 0, %s88
      %s106 = sphi 0, %s106
      %s108 = sphi 0, %s106
      %s109 = sphi 0, %s108
      %s123 = sphi 0, %s109
      %s131 = sphi 0, %s133
      %s134 = sphi 0, %s131
      %s135 = sphi 0, %s134
      %s151 = sphi 0, %s135
    $region4: #{tpu_custom_call.1} parent=1 // loop_header_branch
      %19 = sbr.rel (%p17) target = $region8
    $region5: #{tpu_custom_call.1} parent=1 // loop_body
      %s21 = ssub.s32 %s16, 1
      %s22 = ssub.s32 %s16, 2
      %s29 = sadd.s32 1, %s24
      %p30 = scmp.ge.s32.totalorder %s29, 2
      %s31 = scalar_select %p30, 0, %s29
      %s32 = sadd.s32 1, %s23
      %s33 = scalar_select %p30, %s32, %s23
      %p34 = scmp.ge.s32.totalorder %s33, 2
      %s35 = scalar_select %p34, 0, %s33
      %s36 = ssub.s32 %s23, %s35
      %s37 = ssub.s32 %s24, %s31
      %s38 = sor.u32 %s36, %s37
      %p39 = scmp.eq.s32.totalorder %s38, 0
      %s41 = sadd.s32 %s40, 1
      %s42 = scalar_select %p39, %s40, %s41
      %p45 = pneg %p39
      %p46 = scmp.eq.s32.totalorder %s16, 3
      %p47 = por %p45, %p46
      %p48 = scmp.ne.s32.totalorder %s40, %s43
      %p49 = scmp.eq.s32.totalorder %s16, 0
      %p50 = por %p48, %p49
      %p51 = scmp.ne.s32.totalorder %s40, %s43
      %p52 = scmp.eq.s32.totalorder %s21, 3
      %p53 = por %p51, %p52
      %p54 = scmp.ne.s32.totalorder %s43, %s44
      %p55 = scmp.eq.s32.totalorder %s21, 0
      %p56 = por %p54, %p55
      %p57 = scmp.ne.s32.totalorder %s43, %s44
      %p58 = scmp.eq.s32.totalorder %s22, 3
      %p59 = por %p57, %p58
      %p61 = scmp.ne.s32.totalorder %s44, %s60
      %p62 = scmp.eq.s32.totalorder %s22, 0
      %p63 = por %p61, %p62
      %s65 = sadd.s32 %s64, 1
      %p68 = scmp.eq.s32.totalorder %s16, 3
      %p69 = scmp.ne.s32.totalorder %s64, %s66
      %p70 = scmp.eq.s32.totalorder %s16, 0
      %p71 = por %p69, %p70
      %p72 = scmp.ne.s32.totalorder %s64, %s66
      %p73 = scmp.eq.s32.totalorder %s21, 3
      %p74 = por %p72, %p73
      %p75 = scmp.ne.s32.totalorder %s66, %s67
      %p76 = scmp.eq.s32.totalorder %s21, 0
      %p77 = por %p75, %p76
      %p78 = scmp.ne.s32.totalorder %s66, %s67
      %p79 = scmp.eq.s32.totalorder %s22, 3
      %p80 = por %p78, %p79
      %p82 = scmp.ne.s32.totalorder %s67, %s81
      %p83 = scmp.eq.s32.totalorder %s22, 0
      %p84 = por %p82, %p83
      %s86 = sadd.s32 %s85, 1
      %p89 = scmp.eq.s32.totalorder %s16, 3
      %p90 = scmp.ne.s32.totalorder %s85, %s87
      %p91 = scmp.eq.s32.totalorder %s16, 0
      %p92 = por %p90, %p91
      %p93 = scmp.ne.s32.totalorder %s85, %s87
      %p94 = scmp.eq.s32.totalorder %s21, 3
      %p95 = por %p93, %p94
      %p96 = scmp.ne.s32.totalorder %s87, %s88
      %p97 = scmp.eq.s32.totalorder %s21, 0
      %p98 = por %p96, %p97
      %p99 = scmp.ne.s32.totalorder %s87, %s88
      %p100 = scmp.eq.s32.totalorder %s22, 3
      %p101 = por %p99, %p100
      %p103 = scmp.ne.s32.totalorder %s88, %s102
      %p104 = scmp.eq.s32.totalorder %s22, 0
      %p105 = por %p103, %p104
      %s107 = sadd.s32 %s106, 1
      %p110 = scmp.eq.s32.totalorder %s16, 3
      %p111 = scmp.ne.s32.totalorder %s106, %s108
      %p112 = scmp.eq.s32.totalorder %s16, 0
      %p113 = por %p111, %p112
      %p114 = scmp.ne.s32.totalorder %s106, %s108
      %p115 = scmp.eq.s32.totalorder %s21, 3
      %p116 = por %p114, %p115
      %p117 = scmp.ne.s32.totalorder %s108, %s109
      %p118 = scmp.eq.s32.totalorder %s21, 0
      %p119 = por %p117, %p118
      %p120 = scmp.ne.s32.totalorder %s108, %s109
      %p121 = scmp.eq.s32.totalorder %s22, 3
      %p122 = por %p120, %p121
      %p124 = scmp.ne.s32.totalorder %s109, %s123
      %p125 = scmp.eq.s32.totalorder %s22, 0
      %p126 = por %p124, %p125
      %s127 = ssub.s32 %s23, %s35
      %s128 = ssub.s32 %s24, %s31
      %s129 = sor.u32 %s127, %s128
      %p130 = scmp.eq.s32.totalorder %s129, 0
      %s132 = sadd.s32 %s131, 1
      %s133 = scalar_select %p130, %s131, %s132
      %p136 = pneg %p130
      %p137 = scmp.eq.s32.totalorder %s16, 3
      %p138 = por %p136, %p137
      %p139 = scmp.ne.s32.totalorder %s131, %s134
      %p140 = scmp.eq.s32.totalorder %s16, 0
      %p141 = por %p139, %p140
      %p142 = scmp.ne.s32.totalorder %s131, %s134
      %p143 = scmp.eq.s32.totalorder %s21, 3
      %p144 = por %p142, %p143
      %p145 = scmp.ne.s32.totalorder %s134, %s135
      %p146 = scmp.eq.s32.totalorder %s21, 0
      %p147 = por %p145, %p146
      %p148 = scmp.ne.s32.totalorder %s134, %s135
      %p149 = scmp.eq.s32.totalorder %s22, 3
      %p150 = por %p148, %p149
      %p152 = scmp.ne.s32.totalorder %s135, %s151
      %p153 = scmp.eq.s32.totalorder %s22, 0
      %p154 = por %p152, %p153
      %p155 = scmp.le.s32.totalorder 1, %s16
      %p156 = scmp.lt.s32.totalorder %s16, 5
      %p157 = pnand %p155, %p156
      %p158 = pneg %p157
      // Predicated region
      $region9: #{tpu_custom_call.1} parent=5 // pred_check
        _
      $region10: #{tpu_custom_call.1} parent=5 // pred_check_branch
        %160 = sbr.rel (%p157) target = $region12
      $region11: #{tpu_custom_call.1} parent=5 // pred_region
        %s161 = ssub.s32 %s16, 1
        // Predicated region
        $region13: #{tpu_custom_call.1} parent=11 // pred_check
          %p162 = pneg %p77
        $region14: #{tpu_custom_call.1} parent=11 // pred_check_branch
          %164 = sbr.rel (%p162) target = $region16
        $region15: #{tpu_custom_call.1} parent=11 // pred_region
          _
        $region16: #{tpu_custom_call.1} parent=11 // pred_fallthru
          _
        // Predicated region
        $region17: #{tpu_custom_call.1} parent=11 // pred_check
          %p165 = pneg %p98
        $region18: #{tpu_custom_call.1} parent=11 // pred_check_branch
          %167 = sbr.rel (%p165) target = $region20
        $region19: #{tpu_custom_call.1} parent=11 // pred_region
          _
        $region20: #{tpu_custom_call.1} parent=11 // pred_fallthru
          _
        // Predicated region
        $region21: #{tpu_custom_call.1} parent=11 // pred_check
          %p168 = pneg %p119
        $region22: #{tpu_custom_call.1} parent=11 // pred_check_branch
          %170 = sbr.rel (%p168) target = $region24
        $region23: #{tpu_custom_call.1} parent=11 // pred_region
          _
        $region24: #{tpu_custom_call.1} parent=11 // pred_fallthru
          _
      $region12: #{tpu_custom_call.1} parent=5 // pred_fallthru
        _
      %p171 = scmp.lt.s32.totalorder %s16, 4
      // Predicated region
      $region25: #{tpu_custom_call.1} parent=5 // pred_check
        %p172 = pneg %p171
      $region26: #{tpu_custom_call.1} parent=5 // pred_check_branch
        %174 = sbr.rel (%p172) target = $region28
      $region27: #{tpu_custom_call.1} parent=5 // pred_region
        // Predicated region
        $region29: #{tpu_custom_call.1} parent=27 // pred_check
          %p175 = pneg %p50
        $region30: #{tpu_custom_call.1} parent=27 // pred_check_branch
          %177 = sbr.rel (%p175) target = $region32
        $region31: #{tpu_custom_call.1} parent=27 // pred_region
          %s178 = sand.u32 %s40, 1
          %s179 = scalar_lea.sflag [#allocation3], %s178
          %s180 = sand.u32 %s40, 1
          %s181 = smul.addr %s180, 64
          %s182 = scalar_lea.vmem [#allocation2], %s181
          %s183 = smul.u32 4, %s24
          %s185 = ssub.s32 1024, 1024
          %186 = vsyncadd %s179, %s185
          %s187 = smul.addr %s183, 2
          %s188 = smul.addr %s23, 16
          %s189 = sadd.s32 %s187, %s188
          %s190 = smul.addr %s189, 128
          %s191 = scalar_lea.hbm %s0, %s190
          %s192 = sshll.u32 %s182, 4
          %s193 = int_to_ptr.vmem [resolvable:$true] %s192
          %198 = dma.hbm_to_vmem [thread:$0]  %s191, 1024, %s193, %s179, 256, 256, 16
        $region32: #{tpu_custom_call.1} parent=27 // pred_fallthru
          _
      $region28: #{tpu_custom_call.1} parent=5 // pred_fallthru
        _
      %p199 = scmp.le.s32.totalorder 1, %s16
      %p200 = scmp.lt.s32.totalorder %s16, 5
      %p201 = pnand %p199, %p200
      %p202 = pneg %p201
      // Predicated region
      $region33: #{tpu_custom_call.1} parent=5 // pred_check
        _
      $region34: #{tpu_custom_call.1} parent=5 // pred_check_branch
        %204 = sbr.rel (%p201) target = $region36
      $region35: #{tpu_custom_call.1} parent=5 // pred_region
        %s205 = ssub.s32 %s16, 1
        %s206 = sand.u32 %s43, 1
        %s207 = scalar_lea.sflag [#allocation3], %s206
        %s208 = sand.u32 %s43, 1
        %s209 = smul.addr %s208, 64
        %s210 = scalar_lea.vmem [#allocation2], %s209
        // Predicated region
        $region37: #{tpu_custom_call.1} parent=35 // pred_check
          %p211 = pneg %p56
        $region38: #{tpu_custom_call.1} parent=35 // pred_check_branch
          %213 = sbr.rel (%p211) target = $region40
        $region39: #{tpu_custom_call.1} parent=35 // pred_region
          %214 = dma.done %s207, 1024
        $region40: #{tpu_custom_call.1} parent=35 // pred_fallthru
          _
        %s215 = sand.u32 %s43, 1
        %s216 = scalar_lea.sflag [#allocation3], %s215
        %s217 = sand.u32 %s43, 1
        %s218 = smul.addr %s217, 64
        %s219 = scalar_lea.vmem [#allocation2], %s218
        %p220 = pneg %p56
        %p221 = pneg %p53
        %p222 = pneg %p77
        %p223 = pneg %p74
        %p224 = pneg %p98
        %p225 = pneg %p95
        %p226 = pneg %p119
        %p227 = pneg %p116
        %p228 = pneg %p147
        %p229 = pneg %p144
        %s230 = sand.u32 %s134, 1
        %s231 = scalar_lea.sflag [#allocation4], %s230
        %s232 = sand.u32 %s134, 1
        %s233 = smul.addr %s232, 64
        %s234 = scalar_lea.vmem [#allocation5], %s233
        %s235 = smul.u32 4, %s26
        %s236 = smul.u32 4, %s26
        %v237 = vld [vmem:[%s1] sm:$0xff]
        %v238 = vld [vmem:[%s1 + $0x8] sm:$0xff]
        %v239 = vld [vmem:[%s1 + $0x10] sm:$0xff]
        %v240 = vld [vmem:[%s1 + $0x18] sm:$0xff]
        %v241 = vld [vmem:[%s210] sm:$0xff]
        %v242 = vld [vmem:[%s210 + $0x8] sm:$0xff]
        %v243 = vld [vmem:[%s210 + $0x10] sm:$0xff]
        %v244 = vld [vmem:[%s210 + $0x18] sm:$0xff]
        %v245 = vld [vmem:[%s210 + $0x20] sm:$0xff]
        %v246 = vld [vmem:[%s210 + $0x28] sm:$0xff]
        %v247 = vld [vmem:[%s210 + $0x30] sm:$0xff]
        %v248 = vld [vmem:[%s210 + $0x38] sm:$0xff]
        %v249 = vadd.f32 %v241, %v242
        %250 = vadd.xlane.f32.xlu0 %v249
        %v251 = vpop.xlane.xlu0 %250
        %v252 = vadd.f32 %v243, %v244
        %253 = vadd.xlane.f32.xlu0 %v252
        %v254 = vpop.xlane.xlu0 %253
        %v255 = vadd.f32 %v245, %v246
        %256 = vadd.xlane.f32.xlu0 %v255
        %v257 = vpop.xlane.xlu0 %256
        %v258 = vadd.f32 %v247, %v248
        %259 = vadd.xlane.f32.xlu0 %v258
        %v260 = vpop.xlane.xlu0 %259
        %vm261 = vcmask 261120
        %v263 = vsel %vm261, %v237, 0
        %v266 = vsel %vm261, %v238, 0
        %v269 = vsel %vm261, %v239, 0
        %v272 = vsel %vm261, %v240, 0
        %274 = vmatprep.subr.mxu0 0.0
        %275 = vmatpush1.msra.mxu0 %v251
        %276 = vmatprep.subr.mxu0 0.0
        %277 = vmatpush1.msra.mxu0 %v254
        %278 = vmatprep.subr.mxu0 0.0
        %279 = vmatpush1.msra.mxu0 %v257
        %280 = vmatprep.subr.mxu0 0.0
        %281 = vmatpush1.msra.mxu0 %v260
        %282 = vmatprep.subr.mxu0 0.0
        %283 = vmatpush1.msra.mxu0 0.0
        %284 = vmatprep.subr.mxu0 0.0
        %285 = vmatpush1.msra.mxu0 0.0
        %286 = vmatprep.subr.mxu0 0.0
        %287 = vmatpush1.msra.mxu0 0.0
        %288 = vmatprep.subr.mxu0 0.0
        %289 = vmatpush1.msra.mxu0 0.0
        %290 = vmatprep.subr.mxu0 0.0
        %291 = vmatpush1.msra.mxu0 0.0
        %292 = vmatprep.subr.mxu0 0.0
        %293 = vmatpush1.msra.mxu0 0.0
        %294 = vmatprep.subr.mxu0 0.0
        %295 = vmatpush1.msra.mxu0 0.0
        %296 = vmatprep.subr.mxu0 0.0
        %297 = vmatpush1.msra.mxu0 0.0
        %298 = vmatprep.subr.mxu0 0.0
        %299 = vmatpush1.msra.mxu0 0.0
        %300 = vmatprep.subr.mxu0 0.0
        %301 = vmatpush1.msra.mxu0 0.0
        %302 = vmatprep.subr.mxu0 0.0
        %303 = vmatpush1.msra.mxu0 0.0
        %304 = vmatprep.subr.mxu0 0.0
        %305 = vmatpush1.msra.mxu0 0.0
        %306 = vmatprep.subr.mxu0 0.0
        %307 = vmatpush1.msra.mxu0 0.0
        %308 = vmatprep.subr.mxu0 0.0
        %309 = vmatpush1.msra.mxu0 0.0
        %310 = vmatprep.subr.mxu0 0.0
        %311 = vmatpush1.msra.mxu0 0.0
        %312 = vmatprep.subr.mxu0 0.0
        %313 = vmatpush1.msra.mxu0 0.0
        %314 = vmatprep.subr.mxu0 0.0
        %315 = vmatpush1.msra.mxu0 0.0
        %316 = vmatprep.subr.mxu0 0.0
        %317 = vmatpush1.msra.mxu0 0.0
        %318 = vmatprep.subr.mxu0 0.0
        %319 = vmatpush1.msra.mxu0 0.0
        %320 = vmatprep.subr.mxu0 0.0
        %321 = vmatpush1.msra.mxu0 0.0
        %322 = vmatprep.subr.mxu0 0.0
        %323 = vmatpush1.msra.mxu0 0.0
        %324 = vmatprep.subr.mxu0 0.0
        %325 = vmatpush1.msra.mxu0 0.0
        %326 = vmatprep.subr.mxu0 0.0
        %327 = vmatpush1.msra.mxu0 0.0
        %328 = vmatprep.subr.mxu0 0.0
        %329 = vmatpush1.msra.mxu0 0.0
        %330 = vmatprep.subr.mxu0 0.0
        %331 = vmatpush1.msra.mxu0 0.0
        %332 = vmatprep.subr.mxu0 0.0
        %333 = vmatpush1.msra.mxu0 0.0
        %334 = vmatprep.subr.mxu0 0.0
        %335 = vmatpush1.msra.mxu0 0.0
        %336 = vmatprep.subr.mxu0 0.0
        %337 = vmatpush1.msra.mxu0 0.0
        %338 = vmatprep.mubr.f32.mxu0 0.0
        %339 = vmatmul.mubr.f32.gmra.mrb[0].mxu0 %v263
        %v340 = vpop.f32.mrb[0].mxu0
        %v341 = vadd.f32 0.0, %v340
        %v342 = vpop.f32.mrb[0].mxu0
        %343 = vmatprep.mubr.f32.mxu0 0.0
        %344 = vmatmul.mubr.f32.gmra.mrb[0].mxu0 %v266
        %v345 = vpop.f32.mrb[0].mxu0
        %v346 = vadd.f32 0.0, %v345
        %v347 = vpop.f32.mrb[0].mxu0
        %348 = vmatprep.mubr.f32.mxu0 0.0
        %349 = vmatmul.mubr.f32.gmra.mrb[0].mxu0 %v269
        %v350 = vpop.f32.mrb[0].mxu0
        %v351 = vadd.f32 0.0, %v350
        %v352 = vpop.f32.mrb[0].mxu0
        %353 = vmatprep.mubr.f32.mxu0 0.0
        %354 = vmatmul.mubr.f32.gmra.mrb[0].mxu0 %v272
        %v355 = vpop.f32.mrb[0].mxu0
        %v356 = vadd.f32 0.0, %v355
        %v357 = vpop.f32.mrb[0].mxu0
        %358 = vdwg.mxu0
        %360 = vset.pattern.permute.xlu0 0
        %361 = vperm.xlu0 %360, %v341
        %v362 = vpop.permute.xlu0 %361
        %365 = vset.pattern.permute.xlu0 0
        %366 = vperm.xlu0 %365, %v346
        %v367 = vpop.permute.xlu0 %366
        %370 = vset.pattern.permute.xlu0 0
        %371 = vperm.xlu0 %370, %v351
        %v372 = vpop.permute.xlu0 %371
        %375 = vset.pattern.permute.xlu0 0
        %376 = vperm.xlu0 %375, %v356
        %v377 = vpop.permute.xlu0 %376
        %v379 = vsub.f32 %v241, %v362
        %v380 = vsub.f32 %v242, %v362
        %v381 = vsub.f32 %v243, %v367
        %v382 = vsub.f32 %v244, %v367
        %v383 = vsub.f32 %v245, %v372
        %v384 = vsub.f32 %v246, %v372
        %v385 = vsub.f32 %v247, %v377
        %v386 = vsub.f32 %v248, %v377
        %v387 = vmul.f32 %v379, %v379
        %v388 = vmul.f32 %v380, %v380
        %v389 = vmul.f32 %v381, %v381
        %v390 = vmul.f32 %v382, %v382
        %v391 = vmul.f32 %v383, %v383
        %v392 = vmul.f32 %v384, %v384
        %v393 = vmul.f32 %v385, %v385
        %v394 = vmul.f32 %v386, %v386
        %v395 = vadd.f32 %v387, %v388
        %396 = vadd.xlane.f32.xlu0 %v395
        %v397 = vpop.xlane.xlu0 %396
        %v398 = vadd.f32 %v389, %v390
        %399 = vadd.xlane.f32.xlu0 %v398
        %v400 = vpop.xlane.xlu0 %399
        %v401 = vadd.f32 %v391, %v392
        %402 = vadd.xlane.f32.xlu0 %v401
        %v403 = vpop.xlane.xlu0 %402
        %v404 = vadd.f32 %v393, %v394
        %405 = vadd.xlane.f32.xlu0 %v404
        %v406 = vpop.xlane.xlu0 %405
        %407 = vmatprep.subr.mxu0 0.0
        %408 = vmatpush1.msra.mxu0 %v397
        %409 = vmatprep.subr.mxu0 0.0
        %410 = vmatpush1.msra.mxu0 %v400
        %411 = vmatprep.subr.mxu0 0.0
        %412 = vmatpush1.msra.mxu0 %v403
        %413 = vmatprep.subr.mxu0 0.0
        %414 = vmatpush1.msra.mxu0 %v406
        %415 = vmatprep.subr.mxu0 0.0
        %416 = vmatpush1.msra.mxu0 0.0
        %417 = vmatprep.subr.mxu0 0.0
        %418 = vmatpush1.msra.mxu0 0.0
        %419 = vmatprep.subr.mxu0 0.0
        %420 = vmatpush1.msra.mxu0 0.0
        %421 = vmatprep.subr.mxu0 0.0
        %422 = vmatpush1.msra.mxu0 0.0
        %423 = vmatprep.subr.mxu0 0.0
        %424 = vmatpush1.msra.mxu0 0.0
        %425 = vmatprep.subr.mxu0 0.0
        %426 = vmatpush1.msra.mxu0 0.0
        %427 = vmatprep.subr.mxu0 0.0
        %428 = vmatpush1.msra.mxu0 0.0
        %429 = vmatprep.subr.mxu0 0.0
        %430 = vmatpush1.msra.mxu0 0.0
        %431 = vmatprep.subr.mxu0 0.0
        %432 = vmatpush1.msra.mxu0 0.0
        %433 = vmatprep.subr.mxu0 0.0
        %434 = vmatpush1.msra.mxu0 0.0
        %435 = vmatprep.subr.mxu0 0.0
        %436 = vmatpush1.msra.mxu0 0.0
        %437 = vmatprep.subr.mxu0 0.0
        %438 = vmatpush1.msra.mxu0 0.0
        %439 = vmatprep.subr.mxu0 0.0
        %440 = vmatpush1.msra.mxu0 0.0
        %441 = vmatprep.subr.mxu0 0.0
        %442 = vmatpush1.msra.mxu0 0.0
        %443 = vmatprep.subr.mxu0 0.0
        %444 = vmatpush1.msra.mxu0 0.0
        %445 = vmatprep.subr.mxu0 0.0
        %446 = vmatpush1.msra.mxu0 0.0
        %447 = vmatprep.subr.mxu0 0.0
        %448 = vmatpush1.msra.mxu0 0.0
        %449 = vmatprep.subr.mxu0 0.0
        %450 = vmatpush1.msra.mxu0 0.0
        %451 = vmatprep.subr.mxu0 0.0
        %452 = vmatpush1.msra.mxu0 0.0
        %453 = vmatprep.subr.mxu0 0.0
        %454 = vmatpush1.msra.mxu0 0.0
        %455 = vmatprep.subr.mxu0 0.0
        %456 = vmatpush1.msra.mxu0 0.0
        %457 = vmatprep.subr.mxu0 0.0
        %458 = vmatpush1.msra.mxu0 0.0
        %459 = vmatprep.subr.mxu0 0.0
        %460 = vmatpush1.msra.mxu0 0.0
        %461 = vmatprep.subr.mxu0 0.0
        %462 = vmatpush1.msra.mxu0 0.0
        %463 = vmatprep.subr.mxu0 0.0
        %464 = vmatpush1.msra.mxu0 0.0
        %465 = vmatprep.subr.mxu0 0.0
        %466 = vmatpush1.msra.mxu0 0.0
        %467 = vmatprep.subr.mxu0 0.0
        %468 = vmatpush1.msra.mxu0 0.0
        %469 = vmatprep.subr.mxu0 0.0
        %470 = vmatpush1.msra.mxu0 0.0
        %471 = vmatprep.mubr.f32.mxu0 0.0
        %472 = vmatmul.mubr.f32.gmra.mrb[0].mxu0 %v263
        %v473 = vpop.f32.mrb[0].mxu0
        %v474 = vadd.f32 1e-05, %v473
        %v475 = vpop.f32.mrb[0].mxu0
        %476 = vmatprep.mubr.f32.mxu0 0.0
        %477 = vmatmul.mubr.f32.gmra.mrb[0].mxu0 %v266
        %v478 = vpop.f32.mrb[0].mxu0
        %v479 = vadd.f32 1e-05, %v478
        %v480 = vpop.f32.mrb[0].mxu0
        %481 = vmatprep.mubr.f32.mxu0 0.0
        %482 = vmatmul.mubr.f32.gmra.mrb[0].mxu0 %v269
        %v483 = vpop.f32.mrb[0].mxu0
        %v484 = vadd.f32 1e-05, %v483
        %v485 = vpop.f32.mrb[0].mxu0
        %486 = vmatprep.mubr.f32.mxu0 0.0
        %487 = vmatmul.mubr.f32.gmra.mrb[0].mxu0 %v272
        %v488 = vpop.f32.mrb[0].mxu0
        %v489 = vadd.f32 1e-05, %v488
        %v490 = vpop.f32.mrb[0].mxu0
        %491 = vdwg.mxu0
        %v492 = vrsqrt.pop %v474
        %v493 = vrsqrt.pop %v479
        %v494 = vrsqrt.pop %v484
        %v495 = vrsqrt.pop %v489
        %s496 = smul.u32 %s26, 32
        %s497 = scalar_lea.vmem %s2, %s496
        %v498 = vld [vmem:[%s497] sm:$0xff]
        %v499 = vld [vmem:[%s497 + $0x8] sm:$0xff]
        %v500 = vld [vmem:[%s497 + $0x10] sm:$0xff]
        %v501 = vld [vmem:[%s497 + $0x18] sm:$0xff]
        %s502 = scalar_lea.vmem %s3, %s496
        %v503 = vld [vmem:[%s502] sm:$0xff]
        %v504 = vld [vmem:[%s502 + $0x8] sm:$0xff]
        %v505 = vld [vmem:[%s502 + $0x10] sm:$0xff]
        %v506 = vld [vmem:[%s502 + $0x18] sm:$0xff]
        %v507 = vmul.f32 %v492, %v498
        %v508 = vmul.f32 %v493, %v499
        %v509 = vmul.f32 %v494, %v500
        %v510 = vmul.f32 %v495, %v501
        %v511 = vmul.f32 %v341, %v507
        %v512 = vmul.f32 %v346, %v508
        %v513 = vmul.f32 %v351, %v509
        %v514 = vmul.f32 %v356, %v510
        %v515 = vsub.f32 %v503, %v511
        %v516 = vsub.f32 %v504, %v512
        %v517 = vsub.f32 %v505, %v513
        %v518 = vsub.f32 %v506, %v514
        %520 = vset.pattern.permute.xlu0 0
        %521 = vperm.xlu0 %520, %v507
        %v522 = vpop.permute.xlu0 %521
        %525 = vset.pattern.permute.xlu0 0
        %526 = vperm.xlu0 %525, %v508
        %v527 = vpop.permute.xlu0 %526
        %530 = vset.pattern.permute.xlu0 0
        %531 = vperm.xlu0 %530, %v509
        %v532 = vpop.permute.xlu0 %531
        %535 = vset.pattern.permute.xlu0 0
        %536 = vperm.xlu0 %535, %v510
        %v537 = vpop.permute.xlu0 %536
        %v539 = vmul.f32 %v241, %v522
        %v540 = vmul.f32 %v242, %v522
        %v541 = vmul.f32 %v243, %v527
        %v542 = vmul.f32 %v244, %v527
        %v543 = vmul.f32 %v245, %v532
        %v544 = vmul.f32 %v246, %v532
        %v545 = vmul.f32 %v247, %v537
        %v546 = vmul.f32 %v248, %v537
        %548 = vset.pattern.permute.xlu0 0
        %549 = vperm.xlu0 %548, %v515
        %v550 = vpop.permute.xlu0 %549
        %553 = vset.pattern.permute.xlu0 0
        %554 = vperm.xlu0 %553, %v516
        %v555 = vpop.permute.xlu0 %554
        %558 = vset.pattern.permute.xlu0 0
        %559 = vperm.xlu0 %558, %v517
        %v560 = vpop.permute.xlu0 %559
        %563 = vset.pattern.permute.xlu0 0
        %564 = vperm.xlu0 %563, %v518
        %v565 = vpop.permute.xlu0 %564
        %v567 = vadd.f32 %v539, %v550
        %v568 = vadd.f32 %v540, %v550
        %v569 = vadd.f32 %v541, %v555
        %v570 = vadd.f32 %v542, %v555
        %v571 = vadd.f32 %v543, %v560
        %v572 = vadd.f32 %v544, %v560
        %v573 = vadd.f32 %v545, %v565
        %v574 = vadd.f32 %v546, %v565
        %575 = vst [vmem:[%s234] sm:$0xff] %v567
        %576 = vst [vmem:[%s234 + $0x8] sm:$0xff] %v568
        %577 = vst [vmem:[%s234 + $0x10] sm:$0xff] %v569
        %578 = vst [vmem:[%s234 + $0x18] sm:$0xff] %v570
        %579 = vst [vmem:[%s234 + $0x20] sm:$0xff] %v571
        %580 = vst [vmem:[%s234 + $0x28] sm:$0xff] %v572
        %581 = vst [vmem:[%s234 + $0x30] sm:$0xff] %v573
        %582 = vst [vmem:[%s234 + $0x38] sm:$0xff] %v574
        %s583 = sand.u32 %s134, 1
        %s584 = scalar_lea.sflag [#allocation4], %s583
        %s585 = sand.u32 %s134, 1
        %s586 = smul.addr %s585, 64
        %s587 = scalar_lea.vmem [#allocation5], %s586
        // Predicated region
        $region41: #{tpu_custom_call.1} parent=35 // pred_check
          %p588 = pneg %p144
        $region42: #{tpu_custom_call.1} parent=35 // pred_check_branch
          %590 = sbr.rel (%p588) target = $region44
        $region43: #{tpu_custom_call.1} parent=35 // pred_region
          %s591 = smul.u32 4, %s26
          %s593 = ssub.s32 1024, 1024
          %594 = vsyncadd %s584, %s593
          %s595 = smul.addr %s591, 2
          %s596 = smul.addr %s25, 16
          %s597 = sadd.s32 %s595, %s596
          %s598 = smul.addr %s597, 128
          %s599 = scalar_lea.hbm %s4, %s598
          %s600 = sshll.u32 %s587, 4
          %s601 = int_to_ptr.vmem [resolvable:$true] %s600
          %606 = dma.vmem_to_hbm [thread:$0]  %s601, 1024, %s599, %s584, 256, 256, 16
        $region44: #{tpu_custom_call.1} parent=35 // pred_fallthru
          _
      $region36: #{tpu_custom_call.1} parent=5 // pred_fallthru
        _
      %p607 = scmp.le.s32.totalorder 2, %s16
      // Predicated region
      $region45: #{tpu_custom_call.1} parent=5 // pred_check
        %p608 = pneg %p607
      $region46: #{tpu_custom_call.1} parent=5 // pred_check_branch
        %610 = sbr.rel (%p608) target = $region48
      $region47: #{tpu_custom_call.1} parent=5 // pred_region
        %s611 = ssub.s32 %s16, 2
        // Predicated region
        $region49: #{tpu_custom_call.1} parent=47 // pred_check
          %p612 = pneg %p150
        $region50: #{tpu_custom_call.1} parent=47 // pred_check_branch
          %614 = sbr.rel (%p612) target = $region52
        $region51: #{tpu_custom_call.1} parent=47 // pred_region
          %s615 = sand.u32 %s135, 1
          %s616 = scalar_lea.sflag [#allocation4], %s615
          %s617 = sand.u32 %s135, 1
          %s618 = smul.addr %s617, 64
          %s619 = scalar_lea.vmem [#allocation5], %s618
          %620 = dma.done %s616, 1024
        $region52: #{tpu_custom_call.1} parent=47 // pred_fallthru
          _
      $region48: #{tpu_custom_call.1} parent=5 // pred_fallthru
        _
    $region6: #{tpu_custom_call.1} parent=1 // loop_footer
      %s20 = sadd.s32 1, %s16
    $region7: #{tpu_custom_call.1} parent=1 // loop_footer_branch
      %15 = sbr.rel target = $region3
    $region8: #{tpu_custom_call.1} parent=1 // loop_exit
      _
    %621 = vsyncpa [#allocation3], 1
    %s622 = scalar_lea.sflag [#allocation3], 1
    %623 = vsyncpa %s622, 1
    %624 = vsyncpa [#allocation4], 1
    %s625 = scalar_lea.sflag [#allocation4], 1
    %626 = vsyncpa %s625, 1

</llo_original>
